<compile_context>
chip_gen: v6e
topology: v6e:2x2x1
jax: 0.10.0
libtpu: 0.0.40
codegen_flags: <defaults>
</compile_context>

<pallas_src>
import numpy as np
import jax
import jax.numpy as jnp
from jax.experimental import pallas as pl
from jax.experimental.pallas import tpu as pltpu


def _make_weights(lat_dim=2, n_channels=2, n_feats=5, seed=100):
    """Reproduce the deterministic weight init of GeneratorUniform.__init__."""
    np.random.seed(seed)
    Ws = []
    for _ in range(n_channels):
        w_ = np.random.uniform(-1, 1, (n_feats, lat_dim))
        u, s, vt = np.linalg.svd(w_, full_matrices=False)
        w = u if n_feats >= lat_dim else vt
        Ws.append(np.asarray(w, dtype=np.float32))
    return jnp.asarray(np.stack(Ws, axis=0))  # (n_channels, n_feats, lat_dim)


_MAX_TILE_N = 1024        # rows (lane axis) per grid step; ~25 KiB/tile payload
_VPU_UNROLL_LIMIT = 512   # above CF*lat_dim scalar-FMAs, switch to the MXU path


def _round_up(x, m):
    return ((x + m - 1) // m) * m


def _pick_tile(n_pad, max_tile):
    """Largest multiple of 128 that divides n_pad and is <= max_tile."""
    best, t = 128, 128
    while t <= min(n_pad, max_tile):
        if n_pad % t == 0:
            best = t
        t += 128
    return best


def _vpu_kernel(w_smem, zt_ref, out_ref):
    # w_smem : (CF, lat_dim) f32 scalars in SMEM (tiny, grid-invariant)
    # zt_ref : (lat_dim, TILE_N) f32 in VMEM      -- N on the lane axis
    # out_ref: (CF, TILE_N)     f32 in VMEM       -- lane-dense output slab
    zt = zt_ref[...]
    cf, lat_dim = w_smem.shape
    # Hoist the sublane slices of z once per tile.
    z_rows = [zt[k:k + 1, :] for k in range(lat_dim)]
    rows = []
    for f in range(cf):
        # scalar (SMEM) -> vector splat, full 128-lane FMAs on the VPU.
        acc = w_smem[f, 0] * z_rows[0]
        for k in range(1, lat_dim):
            acc = acc + w_smem[f, k] * z_rows[k]
        rows.append(acc)
    out_ref[...] = jnp.concatenate(rows, axis=0)  # one unmasked full-block store


def _mxu_kernel(w_ref, zt_ref, out_ref):
    # Only taken when the fused output width / contraction depth can actually
    # use the MXU (CF >= ~128 and lat_dim large); weights live in VMEM.
    out_ref[...] = jnp.dot(w_ref[...], zt_ref[...],
                           preferred_element_type=jnp.float32)


def generator_uniform_forward(z, W, max_tile_n=_MAX_TILE_N):
    """z: (N, lat_dim) f32; W: (C, n_feats, lat_dim) f32 -> list of C (N, n_feats)."""
    if isinstance(z, (list, tuple)):
        # Match PyTorch module: recurse over list inputs.
        return [generator_uniform_forward(_, W, max_tile_n) for _ in z]

    z = jnp.asarray(z, jnp.float32)
    W = jnp.asarray(W, jnp.float32)
    N, lat_dim = z.shape
    C, n_feats, lat_dim_w = W.shape
    assert lat_dim == lat_dim_w, "z.shape[1] must equal lat_dim"
    CF = C * n_feats

    # Fuse channels once: row (c*n_feats + f) of w_fused is W[c, f, :].
    w_fused = W.reshape(CF, lat_dim)

    # Lane-dense re-layout of z (N on lanes) + pad N to a multiple of the tile.
    n_pad = _round_up(max(N, 1), 128)
    tile = _pick_tile(n_pad, max_tile_n)
    grid = (n_pad // tile,)
    zt = jnp.zeros((lat_dim, n_pad), jnp.float32).at[:, :N].set(z.T)

    # MXU only pays off once the fused output width approaches the MXU width
    # (128 on v5e, 256 on v6e/v7x) AND the contraction depth is non-trivial;
    # also fall through to it when the scalar-FMA unroll would get too large.
    use_mxu = (CF >= 128 and lat_dim > 8) or (CF * lat_dim > _VPU_UNROLL_LIMIT)

    if use_mxu:
        kernel = _mxu_kernel
        w_spec = pl.BlockSpec((CF, lat_dim), lambda i: (0, 0))
    else:
        kernel = _vpu_kernel
        w_spec = pl.BlockSpec(memory_space=pltpu.MemorySpace.SMEM)

    flops = 2 * N * lat_dim * CF
    # Real (padded) DMA traffic of the chosen layout.
    bytes_accessed = 4 * (lat_dim * n_pad + CF * lat_dim + CF * n_pad)

    out_t = pl.pallas_call(
        kernel,
        out_shape=jax.ShapeDtypeStruct((CF, n_pad), jnp.float32),
        grid_spec=pltpu.PrefetchScalarGridSpec(
            num_scalar_prefetch=0,
            grid=grid,
            in_specs=[
                w_spec,
                pl.BlockSpec((lat_dim, tile), lambda i: (0, i)),
            ],
            out_specs=pl.BlockSpec((CF, tile), lambda i: (0, i)),
        ),
        compiler_params=pltpu.CompilerParams(
            dimension_semantics=("parallel",)),
        cost_estimate=pl.CostEstimate(
            flops=flops, transcendentals=0, bytes_accessed=bytes_accessed),
    )(w_fused, zt)

    # Wrapper-side layout plumbing: drop padding, split channels, back to (N, n_feats).
    out_t = out_t[:, :N]
    return [out_t[c * n_feats:(c + 1) * n_feats, :].T for c in range(C)]


def _reference_forward(z, W):
    z = np.asarray(z, np.float32)
    W = np.asarray(W, np.float32)
    return [z @ W[c].T for c in range(W.shape[0])]


if __name__ == "__main__":
    lat_dim, n_channels, n_feats = 2, 2, 5

    W = _make_weights(lat_dim=lat_dim, n_channels=n_channels,
                      n_feats=n_feats, seed=100)
    key = jax.random.PRNGKey(0)

    # 1) Small batch (matches module defaults; exercises padding N=8 -> 128).
    z = jax.random.normal(key, (8, lat_dim), dtype=jnp.float32)
    obs = [jax.block_until_ready(o) for o in generator_uniform_forward(z, W)]
    for o, r in zip(obs, _reference_forward(z, W)):
        np.testing.assert_allclose(np.asarray(o), r, rtol=1e-5, atol=1e-5)

    # 2) Ragged batch with a forced small tile (exercises the multi-step,
    #    software-pipelined grid and tail padding).
    z2 = jax.random.normal(jax.random.PRNGKey(1), (300, lat_dim),
                           dtype=jnp.float32)
    obs2 = [jax.block_until_ready(o)
            for o in generator_uniform_forward(z2, W, max_tile_n=128)]
    for o, r in zip(obs2, _reference_forward(z2, W)):
        np.testing.assert_allclose(np.asarray(o), r, rtol=1e-5, atol=1e-5)

    print("KERNEL_OK")
</pallas_src>

<mosaic_0001>
module attributes {stable_mosaic.version = 11 : i64} {
  func.func @_vpu_kernel(%arg0: i32, %arg1: memref<10x2xf32, #tpu.memory_space<smem>>, %arg2: memref<2x128xf32, #tpu.memory_space<vmem>>, %arg3: memref<10x128xf32, #tpu.memory_space<vmem>>) attributes {dimension_semantics = [#tpu.dimension_semantics<parallel>], iteration_bounds = array<i64: 1>, scalar_prefetch = 0 : i64, scratch_operands = 0 : i64, tpu.core_type = #tpu.core_type<tc>, window_params = [{transform_indices = @transform_0, window_bounds = array<i64: 10, 2>}, {transform_indices = @transform_1, window_bounds = array<i64: 2, 128>}, {transform_indices = @transform_2, window_bounds = array<i64: 10, 128>}]} {
    %c0 = arith.constant 0 : index
    %c0_0 = arith.constant 0 : index
    %0 = vector.load %arg2[%c0, %c0_0] : memref<2x128xf32, #tpu.memory_space<vmem>>, vector<2x128xf32>
    %1 = vector.extract_strided_slice %0 {offsets = [0, 0], sizes = [1, 128], strides = [1, 1]} : vector<2x128xf32> to vector<1x128xf32>
    %2 = vector.extract_strided_slice %0 {offsets = [1, 0], sizes = [1, 128], strides = [1, 1]} : vector<2x128xf32> to vector<1x128xf32>
    %c0_1 = arith.constant 0 : index
    %c0_2 = arith.constant 0 : index
    %3 = memref.load %arg1[%c0_1, %c0_2] : memref<10x2xf32, #tpu.memory_space<smem>>
    %4 = vector.broadcast %3 : f32 to vector<1x128xf32>
    %5 = arith.mulf %4, %1 : vector<1x128xf32>
    %c0_3 = arith.constant 0 : index
    %c1 = arith.constant 1 : index
    %6 = memref.load %arg1[%c0_3, %c1] : memref<10x2xf32, #tpu.memory_space<smem>>
    %7 = vector.broadcast %6 : f32 to vector<1x128xf32>
    %8 = arith.mulf %7, %2 : vector<1x128xf32>
    %9 = arith.addf %5, %8 : vector<1x128xf32>
    %c1_4 = arith.constant 1 : index
    %c0_5 = arith.constant 0 : index
    %10 = memref.load %arg1[%c1_4, %c0_5] : memref<10x2xf32, #tpu.memory_space<smem>>
    %11 = vector.broadcast %10 : f32 to vector<1x128xf32>
    %12 = arith.mulf %11, %1 : vector<1x128xf32>
    %c1_6 = arith.constant 1 : index
    %c1_7 = arith.constant 1 : index
    %13 = memref.load %arg1[%c1_6, %c1_7] : memref<10x2xf32, #tpu.memory_space<smem>>
    %14 = vector.broadcast %13 : f32 to vector<1x128xf32>
    %15 = arith.mulf %14, %2 : vector<1x128xf32>
    %16 = arith.addf %12, %15 : vector<1x128xf32>
    %c2 = arith.constant 2 : index
    %c0_8 = arith.constant 0 : index
    %17 = memref.load %arg1[%c2, %c0_8] : memref<10x2xf32, #tpu.memory_space<smem>>
    %18 = vector.broadcast %17 : f32 to vector<1x128xf32>
    %19 = arith.mulf %18, %1 : vector<1x128xf32>
    %c2_9 = arith.constant 2 : index
    %c1_10 = arith.constant 1 : index
    %20 = memref.load %arg1[%c2_9, %c1_10] : memref<10x2xf32, #tpu.memory_space<smem>>
    %21 = vector.broadcast %20 : f32 to vector<1x128xf32>
    %22 = arith.mulf %21, %2 : vector<1x128xf32>
    %23 = arith.addf %19, %22 : vector<1x128xf32>
    %c3 = arith.constant 3 : index
    %c0_11 = arith.constant 0 : index
    %24 = memref.load %arg1[%c3, %c0_11] : memref<10x2xf32, #tpu.memory_space<smem>>
    %25 = vector.broadcast %24 : f32 to vector<1x128xf32>
    %26 = arith.mulf %25, %1 : vector<1x128xf32>
    %c3_12 = arith.constant 3 : index
    %c1_13 = arith.constant 1 : index
    %27 = memref.load %arg1[%c3_12, %c1_13] : memref<10x2xf32, #tpu.memory_space<smem>>
    %28 = vector.broadcast %27 : f32 to vector<1x128xf32>
    %29 = arith.mulf %28, %2 : vector<1x128xf32>
    %30 = arith.addf %26, %29 : vector<1x128xf32>
    %c4 = arith.constant 4 : index
    %c0_14 = arith.constant 0 : index
    %31 = memref.load %arg1[%c4, %c0_14] : memref<10x2xf32, #tpu.memory_space<smem>>
    %32 = vector.broadcast %31 : f32 to vector<1x128xf32>
    %33 = arith.mulf %32, %1 : vector<1x128xf32>
    %c4_15 = arith.constant 4 : index
    %c1_16 = arith.constant 1 : index
    %34 = memref.load %arg1[%c4_15, %c1_16] : memref<10x2xf32, #tpu.memory_space<smem>>
    %35 = vector.broadcast %34 : f32 to vector<1x128xf32>
    %36 = arith.mulf %35, %2 : vector<1x128xf32>
    %37 = arith.addf %33, %36 : vector<1x128xf32>
    %c5 = arith.constant 5 : index
    %c0_17 = arith.constant 0 : index
    %38 = memref.load %arg1[%c5, %c0_17] : memref<10x2xf32, #tpu.memory_space<smem>>
    %39 = vector.broadcast %38 : f32 to vector<1x128xf32>
    %40 = arith.mulf %39, %1 : vector<1x128xf32>
    %c5_18 = arith.constant 5 : index
    %c1_19 = arith.constant 1 : index
    %41 = memref.load %arg1[%c5_18, %c1_19] : memref<10x2xf32, #tpu.memory_space<smem>>
    %42 = vector.broadcast %41 : f32 to vector<1x128xf32>
    %43 = arith.mulf %42, %2 : vector<1x128xf32>
    %44 = arith.addf %40, %43 : vector<1x128xf32>
    %c6 = arith.constant 6 : index
    %c0_20 = arith.constant 0 : index
    %45 = memref.load %arg1[%c6, %c0_20] : memref<10x2xf32, #tpu.memory_space<smem>>
    %46 = vector.broadcast %45 : f32 to vector<1x128xf32>
    %47 = arith.mulf %46, %1 : vector<1x128xf32>
    %c6_21 = arith.constant 6 : index
    %c1_22 = arith.constant 1 : index
    %48 = memref.load %arg1[%c6_21, %c1_22] : memref<10x2xf32, #tpu.memory_space<smem>>
    %49 = vector.broadcast %48 : f32 to vector<1x128xf32>
    %50 = arith.mulf %49, %2 : vector<1x128xf32>
    %51 = arith.addf %47, %50 : vector<1x128xf32>
    %c7 = arith.constant 7 : index
    %c0_23 = arith.constant 0 : index
    %52 = memref.load %arg1[%c7, %c0_23] : memref<10x2xf32, #tpu.memory_space<smem>>
    %53 = vector.broadcast %52 : f32 to vector<1x128xf32>
    %54 = arith.mulf %53, %1 : vector<1x128xf32>
    %c7_24 = arith.constant 7 : index
    %c1_25 = arith.constant 1 : index
    %55 = memref.load %arg1[%c7_24, %c1_25] : memref<10x2xf32, #tpu.memory_space<smem>>
    %56 = vector.broadcast %55 : f32 to vector<1x128xf32>
    %57 = arith.mulf %56, %2 : vector<1x128xf32>
    %58 = arith.addf %54, %57 : vector<1x128xf32>
    %c8 = arith.constant 8 : index
    %c0_26 = arith.constant 0 : index
    %59 = memref.load %arg1[%c8, %c0_26] : memref<10x2xf32, #tpu.memory_space<smem>>
    %60 = vector.broadcast %59 : f32 to vector<1x128xf32>
    %61 = arith.mulf %60, %1 : vector<1x128xf32>
    %c8_27 = arith.constant 8 : index
    %c1_28 = arith.constant 1 : index
    %62 = memref.load %arg1[%c8_27, %c1_28] : memref<10x2xf32, #tpu.memory_space<smem>>
    %63 = vector.broadcast %62 : f32 to vector<1x128xf32>
    %64 = arith.mulf %63, %2 : vector<1x128xf32>
    %65 = arith.addf %61, %64 : vector<1x128xf32>
    %c9 = arith.constant 9 : index
    %c0_29 = arith.constant 0 : index
    %66 = memref.load %arg1[%c9, %c0_29] : memref<10x2xf32, #tpu.memory_space<smem>>
    %67 = vector.broadcast %66 : f32 to vector<1x128xf32>
    %68 = arith.mulf %67, %1 : vector<1x128xf32>
    %c9_30 = arith.constant 9 : index
    %c1_31 = arith.constant 1 : index
    %69 = memref.load %arg1[%c9_30, %c1_31] : memref<10x2xf32, #tpu.memory_space<smem>>
    %70 = vector.broadcast %69 : f32 to vector<1x128xf32>
    %71 = arith.mulf %70, %2 : vector<1x128xf32>
    %72 = arith.addf %68, %71 : vector<1x128xf32>
    %73 = tpu.concatenate %9, %16, %23, %30, %37, %44, %51, %58, %65, %72 in 0 : vector<1x128xf32>, vector<1x128xf32>, vector<1x128xf32>, vector<1x128xf32>, vector<1x128xf32>, vector<1x128xf32>, vector<1x128xf32>, vector<1x128xf32>, vector<1x128xf32>, vector<1x128xf32> -> vector<10x128xf32>
    %c0_32 = arith.constant 0 : index
    %c0_33 = arith.constant 0 : index
    %74 = vector.load %arg3[%c0_32, %c0_33] : memref<10x128xf32, #tpu.memory_space<vmem>>, vector<10x128xf32>
    tpu.vector_store %arg3[%c0_32, %c0_33], %73 {strides = array<i32>} : memref<10x128xf32, #tpu.memory_space<vmem>>, vector<10x128xf32>,
    return
  }
  func.func @transform_0(%arg0: i32) -> (i32, i32) {
    %c0_i32 = arith.constant 0 : i32
    %c0_i32_0 = arith.constant 0 : i32
    %c0_i32_1 = arith.constant 0 : i32
    return %c0_i32, %c0_i32_0 : i32, i32
  }
  func.func @transform_1(%arg0: i32) -> (i32, i32) {
    %c0_i32 = arith.constant 0 : i32
    %c0_i32_0 = arith.constant 0 : i32
    return %c0_i32, %arg0 : i32, i32
  }
  func.func @transform_2(%arg0: i32) -> (i32, i32) {
    %c0_i32 = arith.constant 0 : i32
    %c0_i32_0 = arith.constant 0 : i32
    return %c0_i32, %arg0 : i32, i32
  }
}

</mosaic_0001>

<llo_original>
// kernel: tpu_custom_call.1
$region0: #{tpu_custom_call.1}
  #allocation0 [shape = 'u32[]', space=smem, size = 0x4, offset = 0x4, fixed_abs, tag = 'smem constant byte address 0x4 - core index']
  #allocation1 [shape = 'u32[144,128]{1,0:T(1,128)}', space=vmem, size = 0x12000, scoped, tag = 'internal scratch']
  %s0 = inlined_call_operand.vmem [shape: f32[10,2], index: 0, kind: input, shape index: {}]
  %s1 = inlined_call_operand.vmem [shape: f32[2,128], index: 1, kind: input, shape index: {}]
  %s2 = inlined_call_operand.hbm [shape: f32[10,128], index: 2, kind: output, shape index: {}]
  %s3 = sld [smem:[#allocation0]]
  $region22: #{tpu_custom_call.1} parent=0
    _
  %s5 = ssub.s32 1, %s3
  %s6 = scalar_select 0, %s5, %s3
  $region1: #{tpu_custom_call.1} parent=0
    #allocation2 [shape = 'u8[8192]{0}', space=smem, size = 0x2000, scoped, tag = 'input window, operand 0, single buffered']
    #allocation3 [shape = 's32[1]{0}', space=sflag, size = 0x4, scoped, tag = 'scoped memory for tpu_custom_call.1']
    #allocation4 [shape = 's32[1]{0}', space=sflag, size = 0x4, scoped, tag = 'scoped memory for tpu_custom_call.1']
    #allocation5 [shape = 'u8[8192]{0}', space=vmem, size = 0x2000, scoped, tag = 'output window, operand 0, single buffered']
    %7 = vsyncpa [#allocation4], 0
    %8 = vsyncpa [#allocation3], 0
    // Predicated region
    $region2: #{tpu_custom_call.1} parent=1 // pred_check
      _
    $region3: #{tpu_custom_call.1} parent=1 // pred_check_branch
      %10 = sbr.rel (0) target = $region5
    $region4: #{tpu_custom_call.1} parent=1 // pred_region
      %s12 = ssub.s32 256, 256
      %13 = vsyncadd [#allocation4], %s12
      %s14 = sshll.u32 %s0, 4
      %s15 = int_to_ptr.vmem [resolvable:$true] %s14
      %20 = dma.vmem_to_smem %s15, 256, [#allocation2], [#allocation4], 128, 128, 8
    $region5: #{tpu_custom_call.1} parent=1 // pred_fallthru
      _
    // Predicated region
    $region6: #{tpu_custom_call.1} parent=1 // pred_check
      _
    $region7: #{tpu_custom_call.1} parent=1 // pred_check_branch
      %22 = sbr.rel (0) target = $region9
    $region8: #{tpu_custom_call.1} parent=1 // pred_region
      _
    $region9: #{tpu_custom_call.1} parent=1 // pred_fallthru
      _
    // Predicated region
    $region10: #{tpu_custom_call.1} parent=1 // pred_check
      _
    $region11: #{tpu_custom_call.1} parent=1 // pred_check_branch
      %24 = sbr.rel (0) target = $region13
    $region12: #{tpu_custom_call.1} parent=1 // pred_region
      %25 = dma.done [#allocation4], 256
    $region13: #{tpu_custom_call.1} parent=1 // pred_fallthru
      _
    %26 = sfence
    %v27 = vld [vmem:[%s1] sm:$0x3]
    %s28 = sld [smem:[#allocation2]]
    %v29 = vstv %s28
    %v30 = vmul.f32 %v29, %v27
    %s31 = sld [smem:[#allocation2 + $0x1]]
    %v32 = vstv %s31
    %v33 = vmul.f32 %v32, %v27
    %v35 = vrot.slane %v33, 1
    %v37 = vadd.f32 %v30, %v35
    %s38 = sld [smem:[#allocation2 + $0x80]]
    %v39 = vstv %s38
    %v40 = vmul.f32 %v39, %v27
    %s41 = sld [smem:[#allocation2 + $0x81]]
    %v42 = vstv %s41
    %v43 = vmul.f32 %v42, %v27
    %v45 = vrot.slane %v43, 1
    %v47 = vadd.f32 %v40, %v45
    %s48 = sld [smem:[#allocation2 + $0x100]]
    %v49 = vstv %s48
    %v50 = vmul.f32 %v49, %v27
    %s51 = sld [smem:[#allocation2 + $0x101]]
    %v52 = vstv %s51
    %v53 = vmul.f32 %v52, %v27
    %v55 = vrot.slane %v53, 1
    %v57 = vadd.f32 %v50, %v55
    %s58 = sld [smem:[#allocation2 + $0x180]]
    %v59 = vstv %s58
    %v60 = vmul.f32 %v59, %v27
    %s61 = sld [smem:[#allocation2 + $0x181]]
    %v62 = vstv %s61
    %v63 = vmul.f32 %v62, %v27
    %v65 = vrot.slane %v63, 1
    %v67 = vadd.f32 %v60, %v65
    %s68 = sld [smem:[#allocation2 + $0x200]]
    %v69 = vstv %s68
    %v70 = vmul.f32 %v69, %v27
    %s71 = sld [smem:[#allocation2 + $0x201]]
    %v72 = vstv %s71
    %v73 = vmul.f32 %v72, %v27
    %v75 = vrot.slane %v73, 1
    %v77 = vadd.f32 %v70, %v75
    %s78 = sld [smem:[#allocation2 + $0x280]]
    %v79 = vstv %s78
    %v80 = vmul.f32 %v79, %v27
    %s81 = sld [smem:[#allocation2 + $0x281]]
    %v82 = vstv %s81
    %v83 = vmul.f32 %v82, %v27
    %v85 = vrot.slane %v83, 1
    %v87 = vadd.f32 %v80, %v85
    %s88 = sld [smem:[#allocation2 + $0x300]]
    %v89 = vstv %s88
    %v90 = vmul.f32 %v89, %v27
    %s91 = sld [smem:[#allocation2 + $0x301]]
    %v92 = vstv %s91
    %v93 = vmul.f32 %v92, %v27
    %v95 = vrot.slane %v93, 1
    %v97 = vadd.f32 %v90, %v95
    %s98 = sld [smem:[#allocation2 + $0x380]]
    %v99 = vstv %s98
    %v100 = vmul.f32 %v99, %v27
    %s101 = sld [smem:[#allocation2 + $0x381]]
    %v102 = vstv %s101
    %v103 = vmul.f32 %v102, %v27
    %v105 = vrot.slane %v103, 1
    %v107 = vadd.f32 %v100, %v105
    %s108 = sld [smem:[#allocation2 + $0x400]]
    %v109 = vstv %s108
    %v110 = vmul.f32 %v109, %v27
    %s111 = sld [smem:[#allocation2 + $0x401]]
    %v112 = vstv %s111
    %v113 = vmul.f32 %v112, %v27
    %v115 = vrot.slane %v113, 1
    %v117 = vadd.f32 %v110, %v115
    %s118 = sld [smem:[#allocation2 + $0x480]]
    %v119 = vstv %s118
    %v120 = vmul.f32 %v119, %v27
    %s121 = sld [smem:[#allocation2 + $0x481]]
    %v122 = vstv %s121
    %v123 = vmul.f32 %v122, %v27
    %v125 = vrot.slane %v123, 1
    %v127 = vadd.f32 %v120, %v125
    %v129 = vrot.slane %v47, 7
    %v132 = vrot.slane %v57, 6
    %v135 = vrot.slane %v67, 5
    %v138 = vrot.slane %v77, 4
    %v141 = vrot.slane %v87, 3
    %v144 = vrot.slane %v97, 2
    %v147 = vrot.slane %v107, 1
    %v150 = vrot.slane %v127, 7
    %vm152 = vcmask 1040384
    %v153 = vsel %vm152, %v37, %v129
    %vm154 = vcmask 1041408
    %v155 = vsel %vm154, %v153, %v132
    %vm156 = vcmask 1042432
    %v157 = vsel %vm156, %v155, %v135
    %vm158 = vcmask 1043456
    %v159 = vsel %vm158, %v157, %v138
    %vm160 = vcmask 1044480
    %v161 = vsel %vm160, %v159, %v141
    %vm162 = vcmask 1045504
    %v163 = vsel %vm162, %v161, %v144
    %vm164 = vcmask 1046528
    %v165 = vsel %vm164, %v163, %v147
    %v166 = vsel %vm152, %v117, %v150
    %167 = vst [vmem:[#allocation5] sm:$0xff] %v165
    %168 = vst [vmem:[#allocation5 + $0x8] sm:$0x3] %v166
    // Predicated region
    $region14: #{tpu_custom_call.1} parent=1 // pred_check
      _
    $region15: #{tpu_custom_call.1} parent=1 // pred_check_branch
      %170 = sbr.rel (0) target = $region17
    $region16: #{tpu_custom_call.1} parent=1 // pred_region
      %s172 = ssub.s32 256, 256
      %173 = vsyncadd [#allocation3], %s172
      %s174 = sshll.u32 [#allocation5], 4
      %s175 = int_to_ptr.vmem [resolvable:$true] %s174
      %180 = dma.vmem_to_hbm [thread:$0]  %s175, 256, %s2, [#allocation3], 128, 128, 8
    $region17: #{tpu_custom_call.1} parent=1 // pred_fallthru
      _
    // Predicated region
    $region18: #{tpu_custom_call.1} parent=1 // pred_check
      _
    $region19: #{tpu_custom_call.1} parent=1 // pred_check_branch
      %182 = sbr.rel (0) target = $region21
    $region20: #{tpu_custom_call.1} parent=1 // pred_region
      %183 = dma.done [#allocation3], 256
    $region21: #{tpu_custom_call.1} parent=1 // pred_fallthru
      _
    %184 = vsyncpa [#allocation3], 1
    %185 = vsyncpa [#allocation4], 1

</llo_original>
